<compile_context>
chip_gen: v5e
topology: v5e:2x2
jax: 0.10.0
libtpu: 0.0.40
codegen_flags: <defaults>
</compile_context>

<pallas_src>
import jax
import jax.numpy as jnp
from jax.experimental import pallas as pl
from jax.experimental.pallas import tpu as pltpu

HIDDEN = 32


def _round_up(n, m):
    return ((n + m - 1) // m) * m


def _fused_input_kernel(x_ref, w_ref, b_ref, o_ref):
    """o = x @ Weff + beff, for one (entity type, row-tile) grid point.

    x_ref : (1, tm, A_max)   raw continuous attributes (scale folded into Weff)
    w_ref : (1, A_max, H)    effective weight  (embedding ∘ Linear ∘ diag(scale))
    b_ref : (1, 1, H)        effective bias
    o_ref : (1, tm, H)
    """
    y = jnp.dot(x_ref[0], w_ref[0], preferred_element_type=jnp.float32)
    o_ref[0] = (y + b_ref[0]).astype(o_ref.dtype)


def _fold_params(wc, bc, w_lin, b_lin, scale):
    """Collapse per-attribute embedding + Linear(A*H, H) + buffer scale into
    a single (A, H) weight and (H,) bias.

      emb[b,n,a,h] = (x[b,n,a] * scale[a]) * wc[a,h] + bc[a,h]
      out          = emb.reshape(B, N, A*H) @ w_lin.T + b_lin
                   = x @ Weff + beff
    """
    A, H = wc.shape
    wlin_t = w_lin.T.reshape(A, H, H)                     # [a, h_emb, h_out]
    weff = jnp.einsum("ae,aeo->ao", wc, wlin_t)           # (A, H)
    beff = b_lin + jnp.einsum("ae,aeo->o", bc, wlin_t)    # (H,)
    weff = weff * scale[:, None]                          # fold tileWeight/entWeight
    return weff, beff


@jax.jit
def input_module_forward(inp, params, tile_weight, ent_weight):
    """Full Input.forward over the observation dict (single fused kernel)."""
    names = ("Tile", "Entity")
    scales = {"Tile": tile_weight, "Entity": ent_weight}

    folded = {n: _fold_params(*params[n], scales[n]) for n in names}

    xs = {n: inp[n]["Continuous"] for n in names}
    shapes = {n: xs[n].shape for n in names}
    H = folded[names[0]][0].shape[1]

    A_max = max(shapes[n][2] for n in names)
    bn = {n: shapes[n][0] * shapes[n][1] for n in names}
    max_bn = max(bn.values())

    # Large row tiles: grid steps are a serial loop (per-step overhead ~0.35us),
    # and even tm=2048 rows of f32[A_max]/f32[H] is far below VMEM limits.
    tm = min(2048, _round_up(max_bn, 8))
    rows_pad = _round_up(max_bn, tm)

    def pad_rows_attrs(x):
        b, n, a = x.shape
        x2 = x.reshape(b * n, a).astype(jnp.float32)
        return jnp.pad(x2, ((0, rows_pad - b * n), (0, A_max - a)))

    x_all = jnp.stack([pad_rows_attrs(xs[n]) for n in names])             # (T, rows_pad, A_max)
    w_all = jnp.stack([
        jnp.pad(folded[n][0], ((0, A_max - folded[n][0].shape[0]), (0, 0)))
        for n in names
    ]).astype(jnp.float32)                                                # (T, A_max, H)
    b_all = jnp.stack([folded[n][1].reshape(1, H) for n in names]
                      ).astype(jnp.float32)                               # (T, 1, H)

    T = len(names)
    out = pl.pallas_call(
        _fused_input_kernel,
        out_shape=jax.ShapeDtypeStruct((T, rows_pad, H), jnp.float32),
        grid_spec=pltpu.PrefetchScalarGridSpec(
            num_scalar_prefetch=0,
            grid=(T, rows_pad // tm),
            in_specs=[
                pl.BlockSpec((1, tm, A_max), lambda t, r: (t, r, 0)),     # x rows
                pl.BlockSpec((1, A_max, H), lambda t, r: (t, 0, 0)),      # Weff
                pl.BlockSpec((1, 1, H), lambda t, r: (t, 0, 0)),          # beff
            ],
            out_specs=pl.BlockSpec((1, tm, H), lambda t, r: (t, r, 0)),
        ),
        compiler_params=pltpu.CompilerParams(
            dimension_semantics=("parallel", "parallel")),
    )(x_all, w_all, b_all)

    entity_lookup = {"N": inp["Entity"]["N"]}                             # .pop('N') pass-through
    for i, n in enumerate(names):
        b, num, _ = shapes[n]
        entity_lookup[n] = out[i, :b * num].reshape(b, num, H)
    return entity_lookup


def make_params(key, A, H):
    """Deterministic synthetic parameters for one entity type."""
    k1, k2, k3, k4 = jax.random.split(key, 4)
    wc = jax.random.normal(k1, (A, H), jnp.float32) * 0.1     # embedding weight
    bc = jax.random.normal(k2, (A, H), jnp.float32) * 0.1     # embedding bias
    w_lin = jax.random.normal(k3, (H, A * H), jnp.float32) * (1.0 / (A * H) ** 0.5)
    b_lin = jax.random.normal(k4, (H,), jnp.float32) * 0.1
    return wc, bc, w_lin, b_lin


def ref_forward(x, w_scale, wc, bc, w_lin, b_lin):
    """Pure-JAX reference mirroring the un-fused PyTorch forward."""
    xs = x * w_scale                                   # in-place scale in torch
    emb = xs[..., None] * wc + bc                      # (B, N, A, H)
    B, N = x.shape[:2]
    emb = emb.reshape(B, N, -1)                        # .view(B, N, -1)
    return emb @ w_lin.T + b_lin                       # nn.Linear


if __name__ == "__main__":
    key = jax.random.PRNGKey(0)
    k_tile, k_ent, k_ptile, k_pent = jax.random.split(key, 4)

    B, N_TILE, N_ENT = 2, 16, 8
    A_TILE, A_ENT = 4, 13                      # lengths of tileWeight / entWeight

    tile_weight = jnp.array([1.0, 0.0, 0.02, 0.02], jnp.float32)
    ent_weight = jnp.array([1.0, 0.0, 0.0, 0.05, 0.0, 0.02, 0.02,
                            0.1, 0.01, 0.1, 0.1, 0.1, 0.3], jnp.float32)

    inp = {
        "Tile": {"Continuous": jax.random.normal(k_tile, (B, N_TILE, A_TILE), jnp.float32)},
        "Entity": {"Continuous": jax.random.normal(k_ent, (B, N_ENT, A_ENT), jnp.float32),
                   "N": jnp.array([N_ENT, N_ENT], jnp.int32)},
    }

    params = {
        "Tile": make_params(k_ptile, A_TILE, HIDDEN),
        "Entity": make_params(k_pent, A_ENT, HIDDEN),
    }

    out = input_module_forward(inp, params, tile_weight, ent_weight)
    jax.block_until_ready(out)

    # correctness check against pure-JAX reference of the torch semantics
    for name, scale in (("Tile", tile_weight), ("Entity", ent_weight)):
        wc, bc, w_lin, b_lin = params[name]
        ref = ref_forward(inp[name]["Continuous"], scale, wc, bc, w_lin, b_lin)
        assert out[name].shape == ref.shape, name
        assert jnp.allclose(out[name], ref, atol=1e-4, rtol=1e-4), name
    assert jnp.array_equal(out["N"], inp["Entity"]["N"])

    print("KERNEL_OK")
</pallas_src>

<mosaic_0001>
module attributes {stable_mosaic.version = 11 : i64} {
  func.func @_fused_input_kernel(%arg0: i32, %arg1: i32, %arg2: memref<1x32x13xf32, #tpu.memory_space<vmem>>, %arg3: memref<1x13x32xf32, #tpu.memory_space<vmem>>, %arg4: memref<1x1x32xf32, #tpu.memory_space<vmem>>, %arg5: memref<1x32x32xf32, #tpu.memory_space<vmem>>) attributes {dimension_semantics = [#tpu.dimension_semantics<parallel>, #tpu.dimension_semantics<parallel>], iteration_bounds = array<i64: 2, 1>, scalar_prefetch = 0 : i64, scratch_operands = 0 : i64, tpu.core_type = #tpu.core_type<tc>, window_params = [{transform_indices = @transform_0, window_bounds = array<i64: 1, 32, 13>}, {transform_indices = @transform_1, window_bounds = array<i64: 1, 13, 32>}, {transform_indices = @transform_2, window_bounds = array<i64: 1, 1, 32>}, {transform_indices = @transform_3, window_bounds = array<i64: 1, 32, 32>}]} {
    %c0 = arith.constant 0 : index
    %c0_0 = arith.constant 0 : index
    %c0_1 = arith.constant 0 : index
    %0 = vector.load %arg2[%c0, %c0_0, %c0_1] : memref<1x32x13xf32, #tpu.memory_space<vmem>>, vector<1x32x13xf32>
    %1 = vector.shape_cast %0 : vector<1x32x13xf32> to vector<32x13xf32>
    %c0_2 = arith.constant 0 : index
    %c0_3 = arith.constant 0 : index
    %c0_4 = arith.constant 0 : index
    %2 = vector.load %arg3[%c0_2, %c0_3, %c0_4] : memref<1x13x32xf32, #tpu.memory_space<vmem>>, vector<1x13x32xf32>
    %3 = vector.shape_cast %2 : vector<1x13x32xf32> to vector<13x32xf32>
    %cst = arith.constant dense<0.000000e+00> : vector<32x32xf32>
    %4 = tpu.matmul %1, %3, %cst {dimension_numbers = #tpu.dot_dimension_numbers<[1], [0], [0], [1], [0, 0, 1, 1], [], []>} : vector<32x13xf32>, vector<13x32xf32>, vector<32x32xf32> -> vector<32x32xf32>
    %c0_5 = arith.constant 0 : index
    %c0_6 = arith.constant 0 : index
    %c0_7 = arith.constant 0 : index
    %5 = vector.load %arg4[%c0_5, %c0_6, %c0_7] : memref<1x1x32xf32, #tpu.memory_space<vmem>>, vector<1x1x32xf32>
    %6 = vector.shape_cast %5 : vector<1x1x32xf32> to vector<1x32xf32>
    %7 = vector.broadcast %6 : vector<1x32xf32> to vector<32x32xf32>
    %8 = arith.addf %4, %7 : vector<32x32xf32>
    %c0_8 = arith.constant 0 : index
    %c0_9 = arith.constant 0 : index
    %c0_10 = arith.constant 0 : index
    %9 = vector.load %arg5[%c0_8, %c0_9, %c0_10] : memref<1x32x32xf32, #tpu.memory_space<vmem>>, vector<1x32x32xf32>
    %10 = vector.shape_cast %9 : vector<1x32x32xf32> to vector<32x32xf32>
    %11 = vector.shape_cast %8 : vector<32x32xf32> to vector<1x32x32xf32>
    tpu.vector_store %arg5[%c0_8, %c0_9, %c0_10], %11 {strides = array<i32>} : memref<1x32x32xf32, #tpu.memory_space<vmem>>, vector<1x32x32xf32>,
    return
  }
  func.func @transform_0(%arg0: i32, %arg1: i32) -> (i32, i32, i32) {
    %c0_i32 = arith.constant 0 : i32
    %c0_i32_0 = arith.constant 0 : i32
    return %arg0, %arg1, %c0_i32 : i32, i32, i32
  }
  func.func @transform_1(%arg0: i32, %arg1: i32) -> (i32, i32, i32) {
    %c0_i32 = arith.constant 0 : i32
    %c0_i32_0 = arith.constant 0 : i32
    %c0_i32_1 = arith.constant 0 : i32
    return %arg0, %c0_i32, %c0_i32_0 : i32, i32, i32
  }
  func.func @transform_2(%arg0: i32, %arg1: i32) -> (i32, i32, i32) {
    %c0_i32 = arith.constant 0 : i32
    %c0_i32_0 = arith.constant 0 : i32
    %c0_i32_1 = arith.constant 0 : i32
    return %arg0, %c0_i32, %c0_i32_0 : i32, i32, i32
  }
  func.func @transform_3(%arg0: i32, %arg1: i32) -> (i32, i32, i32) {
    %c0_i32 = arith.constant 0 : i32
    %c0_i32_0 = arith.constant 0 : i32
    return %arg0, %arg1, %c0_i32 : i32, i32, i32
  }
}

</mosaic_0001>

<llo_original>
// kernel: input_module_forward.1
$region0: #{input_module_forward.1}
  #allocation0 [shape = 'u32[]', space=smem, size = 0x4, offset = 0x4, fixed_abs, tag = 'smem constant byte address 0x4 - core index']
  #allocation1 [shape = 'u32[72,128]{1,0:T(1,128)}', space=vmem, size = 0x9000, scoped, tag = 'internal scratch']
  %s0 = inlined_call_operand.vmem [shape: f32[2,32,13], index: 0, kind: input, shape index: {}]
  %s1 = inlined_call_operand.vmem [shape: f32[2,13,32], index: 1, kind: input, shape index: {}]
  %s2 = inlined_call_operand.vmem [shape: f32[2,1,32], index: 2, kind: input, shape index: {}]
  %s3 = inlined_call_operand.vmem [shape: f32[2,32,32], index: 3, kind: output, shape index: {}]
  %s4 = sld [smem:[#allocation0]]
  $region45: #{input_module_forward.1} parent=0
    _
  %s6 = ssub.s32 1, %s4
  %s7 = scalar_select 0, %s6, %s4
  loop: start=0, step=1, limit=4
  $region2: #{input_module_forward.1} parent=0 // loop_pre_header
    _
  $region3: #{input_module_forward.1} parent=0 // loop_header
    %s9 = sphi 0, %s13
    %p10 = scmp.ge.s32.totalorder %s9, 4
    %s16 = sphi 0, %s28
    %s17 = sphi 0, %s24
    %s18 = sphi 0, %s16
    %s19 = sphi 0, %s17
    %s20 = sphi 0, %s18
    %s21 = sphi 0, %s19
    %s33 = sphi 0, %s35
    %s36 = sphi 0, %s33
    %s37 = sphi 0, %s36
    %s53 = sphi 0, %s37
    %s59 = sphi 0, %s61
    %s62 = sphi 0, %s59
    %s63 = sphi 0, %s62
    %s79 = sphi 0, %s63
    %s85 = sphi 0, %s87
    %s88 = sphi 0, %s85
    %s89 = sphi 0, %s88
    %s105 = sphi 0, %s89
    %s113 = sphi 0, %s115
    %s116 = sphi 0, %s113
    %s117 = sphi 0, %s116
    %s133 = sphi 0, %s117
  $region4: #{input_module_forward.1} parent=0 // loop_header_branch
    %12 = sbr.rel (%p10) target = $region8
  $region5: #{input_module_forward.1} parent=0 // loop_body
    %s14 = ssub.s32 %s9, 1
    %s15 = ssub.s32 %s9, 2
    %s22 = sadd.s32 1, %s17
    %p23 = scmp.ge.s32.totalorder %s22, 1
    %s24 = scalar_select %p23, 0, %s22
    %s25 = sadd.s32 1, %s16
    %s26 = scalar_select %p23, %s25, %s16
    %p27 = scmp.ge.s32.totalorder %s26, 2
    %s28 = scalar_select %p27, 0, %s26
    %s29 = ssub.s32 %s16, %s28
    %s30 = ssub.s32 %s17, %s24
    %s31 = sor.u32 %s29, %s30
    %p32 = scmp.eq.s32.totalorder %s31, 0
    %s34 = sadd.s32 %s33, 1
    %s35 = scalar_select %p32, %s33, %s34
    %p38 = pneg %p32
    %p39 = scmp.eq.s32.totalorder %s9, 1
    %p40 = por %p38, %p39
    %p41 = scmp.ne.s32.totalorder %s33, %s36
    %p42 = scmp.eq.s32.totalorder %s9, 0
    %p43 = por %p41, %p42
    %p44 = scmp.ne.s32.totalorder %s33, %s36
    %p45 = scmp.eq.s32.totalorder %s14, 1
    %p46 = por %p44, %p45
    %p47 = scmp.ne.s32.totalorder %s36, %s37
    %p48 = scmp.eq.s32.totalorder %s14, 0
    %p49 = por %p47, %p48
    %p50 = scmp.ne.s32.totalorder %s36, %s37
    %p51 = scmp.eq.s32.totalorder %s15, 1
    %p52 = por %p50, %p51
    %p54 = scmp.ne.s32.totalorder %s37, %s53
    %p55 = scmp.eq.s32.totalorder %s15, 0
    %p56 = por %p54, %p55
    %s57 = ssub.s32 %s16, %s28
    %p58 = scmp.eq.s32.totalorder %s57, 0
    %s60 = sadd.s32 %s59, 1
    %s61 = scalar_select %p58, %s59, %s60
    %p64 = pneg %p58
    %p65 = scmp.eq.s32.totalorder %s9, 1
    %p66 = por %p64, %p65
    %p67 = scmp.ne.s32.totalorder %s59, %s62
    %p68 = scmp.eq.s32.totalorder %s9, 0
    %p69 = por %p67, %p68
    %p70 = scmp.ne.s32.totalorder %s59, %s62
    %p71 = scmp.eq.s32.totalorder %s14, 1
    %p72 = por %p70, %p71
    %p73 = scmp.ne.s32.totalorder %s62, %s63
    %p74 = scmp.eq.s32.totalorder %s14, 0
    %p75 = por %p73, %p74
    %p76 = scmp.ne.s32.totalorder %s62, %s63
    %p77 = scmp.eq.s32.totalorder %s15, 1
    %p78 = por %p76, %p77
    %p80 = scmp.ne.s32.totalorder %s63, %s79
    %p81 = scmp.eq.s32.totalorder %s15, 0
    %p82 = por %p80, %p81
    %s83 = ssub.s32 %s16, %s28
    %p84 = scmp.eq.s32.totalorder %s83, 0
    %s86 = sadd.s32 %s85, 1
    %s87 = scalar_select %p84, %s85, %s86
    %p90 = pneg %p84
    %p91 = scmp.eq.s32.totalorder %s9, 1
    %p92 = por %p90, %p91
    %p93 = scmp.ne.s32.totalorder %s85, %s88
    %p94 = scmp.eq.s32.totalorder %s9, 0
    %p95 = por %p93, %p94
    %p96 = scmp.ne.s32.totalorder %s85, %s88
    %p97 = scmp.eq.s32.totalorder %s14, 1
    %p98 = por %p96, %p97
    %p99 = scmp.ne.s32.totalorder %s88, %s89
    %p100 = scmp.eq.s32.totalorder %s14, 0
    %p101 = por %p99, %p100
    %p102 = scmp.ne.s32.totalorder %s88, %s89
    %p103 = scmp.eq.s32.totalorder %s15, 1
    %p104 = por %p102, %p103
    %p106 = scmp.ne.s32.totalorder %s89, %s105
    %p107 = scmp.eq.s32.totalorder %s15, 0
    %p108 = por %p106, %p107
    %s109 = ssub.s32 %s16, %s28
    %s110 = ssub.s32 %s17, %s24
    %s111 = sor.u32 %s109, %s110
    %p112 = scmp.eq.s32.totalorder %s111, 0
    %s114 = sadd.s32 %s113, 1
    %s115 = scalar_select %p112, %s113, %s114
    %p118 = pneg %p112
    %p119 = scmp.eq.s32.totalorder %s9, 1
    %p120 = por %p118, %p119
    %p121 = scmp.ne.s32.totalorder %s113, %s116
    %p122 = scmp.eq.s32.totalorder %s9, 0
    %p123 = por %p121, %p122
    %p124 = scmp.ne.s32.totalorder %s113, %s116
    %p125 = scmp.eq.s32.totalorder %s14, 1
    %p126 = por %p124, %p125
    %p127 = scmp.ne.s32.totalorder %s116, %s117
    %p128 = scmp.eq.s32.totalorder %s14, 0
    %p129 = por %p127, %p128
    %p130 = scmp.ne.s32.totalorder %s116, %s117
    %p131 = scmp.eq.s32.totalorder %s15, 1
    %p132 = por %p130, %p131
    %p134 = scmp.ne.s32.totalorder %s117, %s133
    %p135 = scmp.eq.s32.totalorder %s15, 0
    %p136 = por %p134, %p135
    %p137 = scmp.le.s32.totalorder 1, %s9
    %p138 = scmp.lt.s32.totalorder %s9, 3
    %p139 = pnand %p137, %p138
    %p140 = pneg %p139
    // Predicated region
    $region9: #{input_module_forward.1} parent=5 // pred_check
      _
    $region10: #{input_module_forward.1} parent=5 // pred_check_branch
      %142 = sbr.rel (%p139) target = $region12
    $region11: #{input_module_forward.1} parent=5 // pred_region
      %s143 = ssub.s32 %s9, 1
    $region12: #{input_module_forward.1} parent=5 // pred_fallthru
      _
    %p144 = scmp.lt.s32.totalorder %s9, 2
    // Predicated region
    $region13: #{input_module_forward.1} parent=5 // pred_check
      %p145 = pneg %p144
    $region14: #{input_module_forward.1} parent=5 // pred_check_branch
      %147 = sbr.rel (%p145) target = $region16
    $region15: #{input_module_forward.1} parent=5 // pred_region
      // Predicated region
      $region17: #{input_module_forward.1} parent=15 // pred_check
        %p148 = pneg %p43
      $region18: #{input_module_forward.1} parent=15 // pred_check_branch
        %150 = sbr.rel (%p148) target = $region20
      $region19: #{input_module_forward.1} parent=15 // pred_region
        %s151 = smul.u32 4, %s17
        %p152 = scmp.lt.s32.totalorder %s16, 1
        %s153 = scalar_select %p152, %s16, 1
        %p154 = scmp.lt.s32.totalorder %s151, 3
        %s155 = scalar_select %p154, %s151, 3
        %s156 = smul.addr %s153, 4
        %s157 = sadd.s32 %s155, %s156
        %s158 = smul.addr %s157, 8
        %s159 = scalar_lea.vmem %s0, %s158
        %s160 = smul.u32 4, %s17
      $region20: #{input_module_forward.1} parent=15 // pred_fallthru
        _
      // Predicated region
      $region21: #{input_module_forward.1} parent=15 // pred_check
        %p161 = pneg %p69
      $region22: #{input_module_forward.1} parent=15 // pred_check_branch
        %163 = sbr.rel (%p161) target = $region24
      $region23: #{input_module_forward.1} parent=15 // pred_region
        %p164 = scmp.lt.s32.totalorder %s16, 1
        %s165 = scalar_select %p164, %s16, 1
        %s166 = smul.addr %s165, 2
        %s167 = smul.addr %s166, 8
        %s168 = scalar_lea.vmem %s1, %s167
      $region24: #{input_module_forward.1} parent=15 // pred_fallthru
        _
      // Predicated region
      $region25: #{input_module_forward.1} parent=15 // pred_check
        %p169 = pneg %p95
      $region26: #{input_module_forward.1} parent=15 // pred_check_branch
        %171 = sbr.rel (%p169) target = $region28
      $region27: #{input_module_forward.1} parent=15 // pred_region
        %p172 = scmp.lt.s32.totalorder %s16, 1
        %s173 = scalar_select %p172, %s16, 1
        %s174 = scalar_lea.vmem %s2, %s173
      $region28: #{input_module_forward.1} parent=15 // pred_fallthru
        _
    $region16: #{input_module_forward.1} parent=5 // pred_fallthru
      _
    %p175 = scmp.le.s32.totalorder 1, %s9
    %p176 = scmp.lt.s32.totalorder %s9, 3
    %p177 = pnand %p175, %p176
    %p178 = pneg %p177
    // Predicated region
    $region29: #{input_module_forward.1} parent=5 // pred_check
      _
    $region30: #{input_module_forward.1} parent=5 // pred_check_branch
      %180 = sbr.rel (%p177) target = $region32
    $region31: #{input_module_forward.1} parent=5 // pred_region
      %s181 = ssub.s32 %s9, 1
      %s182 = smul.u32 4, %s19
      %p183 = scmp.lt.s32.totalorder %s18, 1
      %s184 = scalar_select %p183, %s18, 1
      %p185 = scmp.lt.s32.totalorder %s182, 3
      %s186 = scalar_select %p185, %s182, 3
      %s187 = smul.addr %s184, 4
      %s188 = sadd.s32 %s186, %s187
      %s189 = smul.addr %s188, 8
      %s190 = scalar_lea.vmem %s0, %s189
      %p191 = pneg %p49
      %p192 = pneg %p46
      %p193 = scmp.lt.s32.totalorder %s18, 1
      %s194 = scalar_select %p193, %s18, 1
      %s195 = smul.addr %s194, 2
      %s196 = smul.addr %s195, 8
      %s197 = scalar_lea.vmem %s1, %s196
      %p198 = pneg %p75
      %p199 = pneg %p72
      %p200 = scmp.lt.s32.totalorder %s18, 1
      %s201 = scalar_select %p200, %s18, 1
      %s202 = scalar_lea.vmem %s2, %s201
      %p203 = pneg %p101
      %p204 = pneg %p98
      %p205 = pneg %p129
      %p206 = pneg %p126
      %s207 = smul.u32 4, %s19
      %p208 = scmp.lt.s32.totalorder %s18, 1
      %s209 = scalar_select %p208, %s18, 1
      %p210 = scmp.lt.s32.totalorder %s207, 3
      %s211 = scalar_select %p210, %s207, 3
      %s212 = smul.addr %s209, 4
      %s213 = sadd.s32 %s211, %s212
      %s214 = smul.addr %s213, 8
      %s215 = scalar_lea.vmem %s3, %s214
      %s216 = smul.u32 4, %s19
      %p217 = scmp.lt.s32.totalorder %s18, 1
      %s218 = scalar_select %p217, %s18, 1
      %p219 = scmp.lt.s32.totalorder %s216, 3
      %s220 = scalar_select %p219, %s216, 3
      %s221 = smul.addr %s218, 4
      %s222 = sadd.s32 %s220, %s221
      %s223 = smul.addr %s222, 8
      %s224 = scalar_lea.vmem %s0, %s223
      %s225 = smul.u32 4, %s19
      %p226 = scmp.lt.s32.totalorder %s18, 1
      %s227 = scalar_select %p226, %s18, 1
      %s228 = smul.addr %s227, 2
      %s229 = smul.addr %s228, 8
      %s230 = scalar_lea.vmem %s1, %s229
      %p231 = scmp.lt.s32.totalorder %s18, 1
      %s232 = scalar_select %p231, %s18, 1
      %s233 = scalar_lea.vmem %s2, %s232
      %s234 = smul.u32 4, %s19
      %p235 = scmp.lt.s32.totalorder %s18, 1
      %s236 = scalar_select %p235, %s18, 1
      %p237 = scmp.lt.s32.totalorder %s234, 3
      %s238 = scalar_select %p237, %s234, 3
      %s239 = smul.addr %s236, 4
      %s240 = sadd.s32 %s238, %s239
      %s241 = smul.addr %s240, 8
      %s242 = scalar_lea.vmem %s3, %s241
      %s243 = smul.u32 4, %s19
      %v244 = vld [vmem:[%s224] sm:$0xff]
      %v245 = vld [vmem:[%s224 + $0x8] sm:$0xff]
      %v246 = vld [vmem:[%s224 + $0x10] sm:$0xff]
      %v247 = vld [vmem:[%s224 + $0x18] sm:$0xff]
      %v248 = vld [vmem:[%s230] sm:$0xff]
      %v249 = vld [vmem:[%s230 + $0x8] sm:$0x1f]
      %v250 = vld [vmem:[%s233] sm:$0x1]
      %v252 = vperm.slane %v250, 0
      %vm254 = vcmask 105472
      %v256 = vsel %vm254, %v244, 0
      %v259 = vsel %vm254, %v245, 0
      %v262 = vsel %vm254, %v246, 0
      %v265 = vsel %vm254, %v247, 0
      %vm267 = vcmask 1044480
      %v269 = vsel %vm267, %v249, 0
      %271 = vmatpush.msra.mxu0 0.0
      %272 = vmatpush.msra.mxu0 0.0
      %273 = vmatpush.msra.mxu0 0.0
      %274 = vmatpush.msra.mxu0 0.0
      %275 = vmatpush.msra.mxu0 0.0
      %276 = vmatpush.msra.mxu0 0.0
      %277 = vmatpush.msra.mxu0 0.0
      %278 = vmatpush.msra.mxu0 0.0
      %279 = vmatpush.msra.mxu0 0.0
      %280 = vmatpush.msra.mxu0 0.0
      %281 = vmatpush.msra.mxu0 0.0
      %282 = vmatpush.msra.mxu0 0.0
      %283 = vmatpush.msra.mxu0 0.0
      %284 = vmatpush.msra.mxu0 0.0
      %285 = vmatpush.msra.mxu0 %v269
      %286 = vmatpush.msra.mxu0 %v248
      %287 = vmatmul.f32.gmra.mxu0 %v256
      %v288 = vpop.f32.mrf.mxu0
      %v289 = vadd.f32 %v252, %v288
      %290 = vmatmul.f32.gmra.mxu0 %v259
      %v291 = vpop.f32.mrf.mxu0
      %v292 = vadd.f32 %v252, %v291
      %293 = vmatmul.f32.gmra.mxu0 %v262
      %v294 = vpop.f32.mrf.mxu0
      %v295 = vadd.f32 %v252, %v294
      %296 = vmatmul.f32.gmra.mxu0 %v265
      %v297 = vpop.f32.mrf.mxu0
      %v298 = vadd.f32 %v252, %v297
      %299 = vdwg.mxu0
      %vm300 = vcmask 261120
      %301 = vst.msk [vmem:[%s242] sm:$0xff] %vm300, %v289
      %302 = vst.msk [vmem:[%s242 + $0x8] sm:$0xff] %vm300, %v292
      %303 = vst.msk [vmem:[%s242 + $0x10] sm:$0xff] %vm300, %v295
      %304 = vst.msk [vmem:[%s242 + $0x18] sm:$0xff] %vm300, %v298
      %s305 = smul.u32 4, %s19
      %p306 = scmp.lt.s32.totalorder %s18, 1
      %s307 = scalar_select %p306, %s18, 1
      %p308 = scmp.lt.s32.totalorder %s305, 3
      %s309 = scalar_select %p308, %s305, 3
      %s310 = smul.addr %s307, 4
      %s311 = sadd.s32 %s309, %s310
      %s312 = smul.addr %s311, 8
      %s313 = scalar_lea.vmem %s3, %s312
      // Predicated region
      $region33: #{input_module_forward.1} parent=31 // pred_check
        %p314 = pneg %p126
      $region34: #{input_module_forward.1} parent=31 // pred_check_branch
        %316 = sbr.rel (%p314) target = $region36
      $region35: #{input_module_forward.1} parent=31 // pred_region
        %s317 = smul.u32 4, %s19
      $region36: #{input_module_forward.1} parent=31 // pred_fallthru
        _
    $region32: #{input_module_forward.1} parent=5 // pred_fallthru
      _
    %p318 = scmp.le.s32.totalorder 2, %s9
    // Predicated region
    $region37: #{input_module_forward.1} parent=5 // pred_check
      %p319 = pneg %p318
    $region38: #{input_module_forward.1} parent=5 // pred_check_branch
      %321 = sbr.rel (%p319) target = $region40
    $region39: #{input_module_forward.1} parent=5 // pred_region
      %s322 = ssub.s32 %s9, 2
      // Predicated region
      $region41: #{input_module_forward.1} parent=39 // pred_check
        %p323 = pneg %p132
      $region42: #{input_module_forward.1} parent=39 // pred_check_branch
        %325 = sbr.rel (%p323) target = $region44
      $region43: #{input_module_forward.1} parent=39 // pred_region
        %s326 = smul.u32 4, %s21
        %p327 = scmp.lt.s32.totalorder %s20, 1
        %s328 = scalar_select %p327, %s20, 1
        %p329 = scmp.lt.s32.totalorder %s326, 3
        %s330 = scalar_select %p329, %s326, 3
        %s331 = smul.addr %s328, 4
        %s332 = sadd.s32 %s330, %s331
        %s333 = smul.addr %s332, 8
        %s334 = scalar_lea.vmem %s3, %s333
      $region44: #{input_module_forward.1} parent=39 // pred_fallthru
        _
    $region40: #{input_module_forward.1} parent=5 // pred_fallthru
      _
  $region6: #{input_module_forward.1} parent=0 // loop_footer
    %s13 = sadd.s32 1, %s9
  $region7: #{input_module_forward.1} parent=0 // loop_footer_branch
    %8 = sbr.rel target = $region3
  $region8: #{input_module_forward.1} parent=0 // loop_exit
    _

</llo_original>
